<compile_context>
chip_gen: v7x
topology: tpu7x:2x2x1
jax: 0.10.0
libtpu: 0.0.40
codegen_flags: <defaults>
</compile_context>

<pallas_src>
import jax
import jax.numpy as jnp
from jax import lax
from jax.experimental import pallas as pl
from jax.experimental.pallas import tpu as pltpu

BN_EPS = 1e-5


def dense_bn_kernel(x_ref, wt_ref, p_ref, o_ref):
    x = x_ref[...]                                # (N, inc)   native dtype
    wt = wt_ref[...]                              # (inc, T)   native dtype
    p = p_ref[...].astype(jnp.float32)            # (3, T) = [bias; gamma; beta]
    bias = p[0:1, :]
    gamma = p[1:2, :]
    beta = p[2:3, :]

    # Linear: MXU matmul with f32 accumulation; bias add on the f32 accumulator.
    y = jnp.dot(x, wt, preferred_element_type=jnp.float32) + bias   # (N, T)

    # BatchNorm1d, training-mode semantics (batch mean, biased batch variance),
    # computed per-feature over the batch axis -> entirely tile-local.
    mean = jnp.mean(y, axis=0, keepdims=True)                       # (1, T)
    d = y - mean                                                    # reused once
    var = jnp.mean(d * d, axis=0, keepdims=True)                    # (1, T)

    # Fold the BN affine into one scale/shift: z = y * scale + shift.
    scale = gamma * lax.rsqrt(var + BN_EPS)                         # (1, T)
    shift = beta - mean * scale                                     # (1, T)
    z = y * scale + shift                                           # (N, T)

    # Sigmoid: exp on the EUP, approximate reciprocal on the EUP as well, so
    # the whole epilogue stays off the VALU slot.
    o_ref[...] = pl.reciprocal(1.0 + jnp.exp(-z), approx=True).astype(o_ref.dtype)


def prepare_dense_bn_params(weight, bias, gamma, beta):
    """One-time parameter setup (do NOT call per forward):
    pre-transpose the PyTorch Linear weight (ouc, inc) -> (inc, ouc) and pack
    bias/gamma/beta into a single (3, ouc) slab."""
    wt = jnp.asarray(weight).T                                      # (inc, ouc)
    params = jnp.stack(
        [jnp.asarray(bias), jnp.asarray(gamma), jnp.asarray(beta)], axis=0
    )                                                               # (3, ouc)
    return wt, params


def dense_bn_forward(x, wt, params, *, tile_ouc=128):
    """x: (N, inc); wt: (inc, ouc) pre-transposed; params: (3, ouc)."""
    n, inc = x.shape
    ouc = wt.shape[1]
    if ouc % tile_ouc != 0:
        tile_ouc = ouc  # fall back to one lane-dense tile if ouc not 128-aligned
    grid = (ouc // tile_ouc,)

    # Advisory cost estimate so XLA schedules producers/consumers around us.
    out_bytes = n * ouc * x.dtype.itemsize
    bytes_accessed = (x.size * x.dtype.itemsize
                      + wt.size * wt.dtype.itemsize
                      + params.size * params.dtype.itemsize
                      + out_bytes)
    cost = pl.CostEstimate(flops=2 * n * inc * ouc,
                           transcendentals=2 * n * ouc,
                           bytes_accessed=bytes_accessed)

    # Explicit VMEM budget: x resident + double-buffered weight / param /
    # output tiles + f32 intermediates.  Capped at 48 MiB to leave headroom on
    # v7x (64 MiB / TC).
    itm = x.dtype.itemsize
    vmem_needed = (n * inc * itm
                   + 2 * inc * tile_ouc * wt.dtype.itemsize
                   + 2 * 3 * tile_ouc * params.dtype.itemsize
                   + 2 * n * tile_ouc * itm
                   + 4 * n * tile_ouc * 4)
    vmem_limit = int(min(max(2 * vmem_needed, 8 << 20), 48 << 20))

    return pl.pallas_call(
        dense_bn_kernel,
        out_shape=jax.ShapeDtypeStruct((n, ouc), x.dtype),
        grid=grid,
        in_specs=[
            pl.BlockSpec((n, inc), lambda j: (0, 0)),          # x: full-resident
            pl.BlockSpec((inc, tile_ouc), lambda j: (0, j)),   # weight tile
            pl.BlockSpec((3, tile_ouc), lambda j: (0, j)),     # [bias;gamma;beta]
        ],
        out_specs=pl.BlockSpec((n, tile_ouc), lambda j: (0, j)),
        compiler_params=pltpu.CompilerParams(
            dimension_semantics=("parallel",),
            vmem_limit_bytes=vmem_limit),
        cost_estimate=cost,
    )(x, wt, params)


def reference_forward(x, weight, bias, gamma, beta):
    y = x @ weight.T + bias
    mean = jnp.mean(y, axis=0, keepdims=True)
    var = jnp.mean((y - mean) ** 2, axis=0, keepdims=True)
    z = (y - mean) / jnp.sqrt(var + BN_EPS) * gamma + beta
    return jax.nn.sigmoid(z)


if __name__ == "__main__":
    # Small shapes consistent with dense_bn(inc, ouc) acting on (batch, inc).
    # OUC = 256 with TILE_OUC = 128 exercises a real 2-step grid.
    N, INC, OUC = 16, 64, 256

    key = jax.random.PRNGKey(0)
    kx, kw, kb, kg, kbe = jax.random.split(key, 5)

    x = jax.random.normal(kx, (N, INC), dtype=jnp.float32)
    weight = jax.random.normal(kw, (OUC, INC), dtype=jnp.float32) * 0.1   # Linear.weight
    bias = jax.random.normal(kb, (OUC,), dtype=jnp.float32) * 0.1         # Linear.bias
    gamma = 1.0 + 0.1 * jax.random.normal(kg, (OUC,), dtype=jnp.float32)  # BN.weight
    beta = 0.1 * jax.random.normal(kbe, (OUC,), dtype=jnp.float32)        # BN.bias

    # One-time parameter setup (weight transpose + param packing), outside the
    # per-call path.
    wt, params = prepare_dense_bn_params(weight, bias, gamma, beta)

    fwd = jax.jit(dense_bn_forward)
    out = fwd(x, wt, params)
    out = jax.block_until_ready(out)

    ref = reference_forward(x, weight, bias, gamma, beta)
    assert out.shape == (N, OUC)
    # Tolerance accounts for the EUP approximate-reciprocal sigmoid path.
    assert jnp.allclose(out, ref, atol=2e-3, rtol=2e-3), "mismatch vs reference"

    print("KERNEL_OK")
</pallas_src>

<mosaic_0001>
module attributes {stable_mosaic.version = 11 : i64} {
  func.func @dense_bn_kernel(%arg0: i32, %arg1: memref<16x64xf32, #tpu.memory_space<vmem>>, %arg2: memref<64x128xf32, #tpu.memory_space<vmem>>, %arg3: memref<3x128xf32, #tpu.memory_space<vmem>>, %arg4: memref<16x128xf32, #tpu.memory_space<vmem>>) attributes {dimension_semantics = [#tpu.dimension_semantics<parallel>], iteration_bounds = array<i64: 2>, scalar_prefetch = 0 : i64, scratch_operands = 0 : i64, tpu.core_type = #tpu.core_type<tc>, window_params = [{pipeline_mode = #tpu.pipeline_mode<synchronous>, transform_indices = @transform_0, window_bounds = array<i64: 16, 64>}, {transform_indices = @transform_1, window_bounds = array<i64: 64, 128>}, {transform_indices = @transform_2, window_bounds = array<i64: 3, 128>}, {transform_indices = @transform_3, window_bounds = array<i64: 16, 128>}]} {
    %c0 = arith.constant 0 : index
    %c0_0 = arith.constant 0 : index
    %0 = vector.load %arg1[%c0, %c0_0] : memref<16x64xf32, #tpu.memory_space<vmem>>, vector<16x64xf32>
    %c0_1 = arith.constant 0 : index
    %c0_2 = arith.constant 0 : index
    %1 = vector.load %arg2[%c0_1, %c0_2] : memref<64x128xf32, #tpu.memory_space<vmem>>, vector<64x128xf32>
    %c0_3 = arith.constant 0 : index
    %c0_4 = arith.constant 0 : index
    %2 = vector.load %arg3[%c0_3, %c0_4] : memref<3x128xf32, #tpu.memory_space<vmem>>, vector<3x128xf32>
    %3 = vector.extract_strided_slice %2 {offsets = [0, 0], sizes = [1, 128], strides = [1, 1]} : vector<3x128xf32> to vector<1x128xf32>
    %4 = vector.extract_strided_slice %2 {offsets = [1, 0], sizes = [1, 128], strides = [1, 1]} : vector<3x128xf32> to vector<1x128xf32>
    %5 = vector.extract_strided_slice %2 {offsets = [2, 0], sizes = [1, 128], strides = [1, 1]} : vector<3x128xf32> to vector<1x128xf32>
    %cst = arith.constant dense<0.000000e+00> : vector<16x128xf32>
    %6 = tpu.matmul %0, %1, %cst {dimension_numbers = #tpu.dot_dimension_numbers<[1], [0], [0], [1], [0, 0, 1, 1], [], []>} : vector<16x64xf32>, vector<64x128xf32>, vector<16x128xf32> -> vector<16x128xf32>
    %7 = vector.broadcast %3 : vector<1x128xf32> to vector<16x128xf32>
    %8 = arith.addf %6, %7 : vector<16x128xf32>
    %cst_5 = arith.constant dense<0.000000e+00> : vector<128xf32>
    %9 = vector.multi_reduction <add>, %8, %cst_5 [0] : vector<16x128xf32> to vector<128xf32>
    %10 = vector.shape_cast %9 : vector<128xf32> to vector<1x128xf32>
    %cst_6 = arith.constant 1.600000e+01 : f32
    %11 = vector.broadcast %cst_6 : f32 to vector<1x128xf32>
    %12 = arith.divf %10, %11 : vector<1x128xf32>
    %13 = vector.broadcast %12 : vector<1x128xf32> to vector<16x128xf32>
    %14 = arith.subf %8, %13 : vector<16x128xf32>
    %15 = arith.mulf %14, %14 : vector<16x128xf32>
    %cst_7 = arith.constant dense<0.000000e+00> : vector<128xf32>
    %16 = vector.multi_reduction <add>, %15, %cst_7 [0] : vector<16x128xf32> to vector<128xf32>
    %17 = vector.shape_cast %16 : vector<128xf32> to vector<1x128xf32>
    %cst_8 = arith.constant 1.600000e+01 : f32
    %18 = vector.broadcast %cst_8 : f32 to vector<1x128xf32>
    %19 = arith.divf %17, %18 : vector<1x128xf32>
    %cst_9 = arith.constant 9.99999974E-6 : f32
    %20 = vector.broadcast %cst_9 : f32 to vector<1x128xf32>
    %21 = arith.addf %19, %20 : vector<1x128xf32>
    %22 = math.rsqrt %21 : vector<1x128xf32>
    %23 = arith.mulf %4, %22 : vector<1x128xf32>
    %24 = arith.mulf %12, %23 : vector<1x128xf32>
    %25 = arith.subf %5, %24 : vector<1x128xf32>
    %26 = vector.broadcast %23 : vector<1x128xf32> to vector<16x128xf32>
    %27 = arith.mulf %8, %26 : vector<16x128xf32>
    %28 = vector.broadcast %25 : vector<1x128xf32> to vector<16x128xf32>
    %29 = arith.addf %27, %28 : vector<16x128xf32>
    %cst_10 = arith.constant 0.000000e+00 : f32
    %30 = vector.broadcast %cst_10 : f32 to vector<16x128xf32>
    %31 = arith.subf %30, %29 : vector<16x128xf32>
    %32 = math.exp %31 : vector<16x128xf32>
    %cst_11 = arith.constant 1.000000e+00 : f32
    %33 = vector.broadcast %cst_11 : f32 to vector<16x128xf32>
    %34 = arith.addf %33, %32 : vector<16x128xf32>
    %35 = tpu.reciprocal %34 {approx = true} : vector<16x128xf32> -> vector<16x128xf32>
    %c0_12 = arith.constant 0 : index
    %c0_13 = arith.constant 0 : index
    %36 = vector.load %arg4[%c0_12, %c0_13] : memref<16x128xf32, #tpu.memory_space<vmem>>, vector<16x128xf32>
    tpu.vector_store %arg4[%c0_12, %c0_13], %35 {strides = array<i32>} : memref<16x128xf32, #tpu.memory_space<vmem>>, vector<16x128xf32>,
    return
  }
  func.func @transform_0(%arg0: i32) -> (i32, i32) {
    %c0_i32 = arith.constant 0 : i32
    %c0_i32_0 = arith.constant 0 : i32
    %c0_i32_1 = arith.constant 0 : i32
    return %c0_i32, %c0_i32_0 : i32, i32
  }
  func.func @transform_1(%arg0: i32) -> (i32, i32) {
    %c0_i32 = arith.constant 0 : i32
    %c0_i32_0 = arith.constant 0 : i32
    return %c0_i32, %arg0 : i32, i32
  }
  func.func @transform_2(%arg0: i32) -> (i32, i32) {
    %c0_i32 = arith.constant 0 : i32
    %c0_i32_0 = arith.constant 0 : i32
    return %c0_i32, %arg0 : i32, i32
  }
  func.func @transform_3(%arg0: i32) -> (i32, i32) {
    %c0_i32 = arith.constant 0 : i32
    %c0_i32_0 = arith.constant 0 : i32
    return %c0_i32, %arg0 : i32, i32
  }
}

</mosaic_0001>

<llo_original>
// kernel: dense_bn_forward.1
$region0: #{dense_bn_forward.1}
  #allocation0 [shape = 'u32[]', space=smem, size = 0x4, offset = 0x4, fixed_abs, tag = 'smem constant byte address 0x4 - core index']
  #allocation1 [shape = 'u32[144,128]{1,0:T(1,128)}', space=vmem, size = 0x12000, scoped, tag = 'internal scratch']
  %s0 = inlined_call_operand.hbm [shape: f32[16,64], index: 0, kind: input, shape index: {}]
  %s1 = inlined_call_operand.hbm [shape: f32[64,256], index: 1, kind: input, shape index: {}]
  %s2 = inlined_call_operand.hbm [shape: f32[3,256], index: 2, kind: input, shape index: {}]
  %s3 = inlined_call_operand.hbm [shape: f32[16,256], index: 3, kind: output, shape index: {}]
  %s4 = sld [smem:[#allocation0]]
  $region57: #{dense_bn_forward.1} parent=0
    _
  %s6 = ssub.s32 1, %s4
  %s7 = scalar_select 0, %s6, %s4
  $region1: #{dense_bn_forward.1} parent=0
    #allocation2 [shape = 'u8[8192]{0}', space=vmem, size = 0x2000, scoped, tag = 'input window, operand 0, single buffered']
    #allocation3 [shape = 's32[2]{0}', space=sflag, size = 0x8, scoped, tag = 'scoped memory for dense_bn_forward.1']
    #allocation4 [shape = 's32[2]{0}', space=sflag, size = 0x8, scoped, tag = 'scoped memory for dense_bn_forward.1']
    #allocation5 [shape = 'u8[65536]{0}', space=vmem, size = 0x10000, scoped, tag = 'input window, operand 1']
    #allocation6 [shape = 's32[2]{0}', space=sflag, size = 0x8, scoped, tag = 'scoped memory for dense_bn_forward.1']
    #allocation7 [shape = 'u8[4096]{0}', space=vmem, size = 0x1000, scoped, tag = 'input window, operand 2']
    #allocation8 [shape = 'u8[16384]{0}', space=vmem, size = 0x4000, scoped, tag = 'output window, operand 0']
    %8 = vsyncpa [#allocation3], 0
    %9 = vsyncpa [#allocation6], 0
    %s10 = scalar_lea.sflag [#allocation6], 1
    %11 = vsyncpa %s10, 0
    %12 = vsyncpa [#allocation4], 0
    %s13 = scalar_lea.sflag [#allocation4], 1
    %14 = vsyncpa %s13, 0
    loop: start=0, step=1, limit=4
    $region2: #{dense_bn_forward.1} parent=1 // loop_pre_header
      _
    $region3: #{dense_bn_forward.1} parent=1 // loop_header
      %s16 = sphi 0, %s20
      %p17 = scmp.ge.s32.totalorder %s16, 4
      %s24 = sphi 0, %s24
      %s26 = sphi 0, %s24
      %s27 = sphi 0, %s26
      %s41 = sphi 0, %s27
      %s47 = sphi 0, %s49
      %s50 = sphi 0, %s47
      %s51 = sphi 0, %s50
      %s67 = sphi 0, %s51
      %s73 = sphi 0, %s75
      %s76 = sphi 0, %s73
      %s77 = sphi 0, %s76
      %s93 = sphi 0, %s77
      %s99 = sphi 0, %s101
      %s102 = sphi 0, %s99
      %s103 = sphi 0, %s102
      %s119 = sphi 0, %s103
    $region4: #{dense_bn_forward.1} parent=1 // loop_header_branch
      %19 = sbr.rel (%p17) target = $region8
    $region5: #{dense_bn_forward.1} parent=1 // loop_body
      %s21 = ssub.s32 %s16, 1
      %s22 = ssub.s32 %s16, 2
      %s23 = sadd.s32 %s16, 1
      %s25 = sadd.s32 %s24, 1
      %p28 = scmp.eq.s32.totalorder %s16, 1
      %p29 = scmp.ne.s32.totalorder %s24, %s26
      %p30 = scmp.eq.s32.totalorder %s16, 0
      %p31 = por %p29, %p30
      %p32 = scmp.ne.s32.totalorder %s24, %s26
      %p33 = scmp.eq.s32.totalorder %s21, 1
      %p34 = por %p32, %p33
      %p35 = scmp.ne.s32.totalorder %s26, %s27
      %p36 = scmp.eq.s32.totalorder %s21, 0
      %p37 = por %p35, %p36
      %p38 = scmp.ne.s32.totalorder %s26, %s27
      %p39 = scmp.eq.s32.totalorder %s22, 1
      %p40 = por %p38, %p39
      %p42 = scmp.ne.s32.totalorder %s27, %s41
      %p43 = scmp.eq.s32.totalorder %s22, 0
      %p44 = por %p42, %p43
      %s45 = ssub.s32 %s16, %s23
      %p46 = scmp.eq.s32.totalorder %s45, 0
      %s48 = sadd.s32 %s47, 1
      %s49 = scalar_select %p46, %s47, %s48
      %p52 = pneg %p46
      %p53 = scmp.eq.s32.totalorder %s16, 1
      %p54 = por %p52, %p53
      %p55 = scmp.ne.s32.totalorder %s47, %s50
      %p56 = scmp.eq.s32.totalorder %s16, 0
      %p57 = por %p55, %p56
      %p58 = scmp.ne.s32.totalorder %s47, %s50
      %p59 = scmp.eq.s32.totalorder %s21, 1
      %p60 = por %p58, %p59
      %p61 = scmp.ne.s32.totalorder %s50, %s51
      %p62 = scmp.eq.s32.totalorder %s21, 0
      %p63 = por %p61, %p62
      %p64 = scmp.ne.s32.totalorder %s50, %s51
      %p65 = scmp.eq.s32.totalorder %s22, 1
      %p66 = por %p64, %p65
      %p68 = scmp.ne.s32.totalorder %s51, %s67
      %p69 = scmp.eq.s32.totalorder %s22, 0
      %p70 = por %p68, %p69
      %s71 = ssub.s32 %s16, %s23
      %p72 = scmp.eq.s32.totalorder %s71, 0
      %s74 = sadd.s32 %s73, 1
      %s75 = scalar_select %p72, %s73, %s74
      %p78 = pneg %p72
      %p79 = scmp.eq.s32.totalorder %s16, 1
      %p80 = por %p78, %p79
      %p81 = scmp.ne.s32.totalorder %s73, %s76
      %p82 = scmp.eq.s32.totalorder %s16, 0
      %p83 = por %p81, %p82
      %p84 = scmp.ne.s32.totalorder %s73, %s76
      %p85 = scmp.eq.s32.totalorder %s21, 1
      %p86 = por %p84, %p85
      %p87 = scmp.ne.s32.totalorder %s76, %s77
      %p88 = scmp.eq.s32.totalorder %s21, 0
      %p89 = por %p87, %p88
      %p90 = scmp.ne.s32.totalorder %s76, %s77
      %p91 = scmp.eq.s32.totalorder %s22, 1
      %p92 = por %p90, %p91
      %p94 = scmp.ne.s32.totalorder %s77, %s93
      %p95 = scmp.eq.s32.totalorder %s22, 0
      %p96 = por %p94, %p95
      %s97 = ssub.s32 %s16, %s23
      %p98 = scmp.eq.s32.totalorder %s97, 0
      %s100 = sadd.s32 %s99, 1
      %s101 = scalar_select %p98, %s99, %s100
      %p104 = pneg %p98
      %p105 = scmp.eq.s32.totalorder %s16, 1
      %p106 = por %p104, %p105
      %p107 = scmp.ne.s32.totalorder %s99, %s102
      %p108 = scmp.eq.s32.totalorder %s16, 0
      %p109 = por %p107, %p108
      %p110 = scmp.ne.s32.totalorder %s99, %s102
      %p111 = scmp.eq.s32.totalorder %s21, 1
      %p112 = por %p110, %p111
      %p113 = scmp.ne.s32.totalorder %s102, %s103
      %p114 = scmp.eq.s32.totalorder %s21, 0
      %p115 = por %p113, %p114
      %p116 = scmp.ne.s32.totalorder %s102, %s103
      %p117 = scmp.eq.s32.totalorder %s22, 1
      %p118 = por %p116, %p117
      %p120 = scmp.ne.s32.totalorder %s103, %s119
      %p121 = scmp.eq.s32.totalorder %s22, 0
      %p122 = por %p120, %p121
      %p123 = scmp.le.s32.totalorder 1, %s16
      %p124 = scmp.lt.s32.totalorder %s16, 3
      %p125 = pnand %p123, %p124
      %p126 = pneg %p125
      // Predicated region
      $region9: #{dense_bn_forward.1} parent=5 // pred_check
        _
      $region10: #{dense_bn_forward.1} parent=5 // pred_check_branch
        %128 = sbr.rel (%p125) target = $region12
      $region11: #{dense_bn_forward.1} parent=5 // pred_region
        %s129 = ssub.s32 %s16, 1
        // Predicated region
        $region13: #{dense_bn_forward.1} parent=11 // pred_check
          %p130 = pneg %p37
        $region14: #{dense_bn_forward.1} parent=11 // pred_check_branch
          %132 = sbr.rel (%p130) target = $region16
        $region15: #{dense_bn_forward.1} parent=11 // pred_region
          %s134 = ssub.s32 256, 256
          %135 = vsyncadd [#allocation3], %s134
          %s136 = sshll.u32 [#allocation2], 4
          %s137 = int_to_ptr.vmem [resolvable:$true] %s136
          %142 = dma.hbm_to_vmem [thread:$0]  %s0, 256, %s137, [#allocation3], 128, 128, 8
        $region16: #{dense_bn_forward.1} parent=11 // pred_fallthru
          _
      $region12: #{dense_bn_forward.1} parent=5 // pred_fallthru
        _
      %p143 = scmp.lt.s32.totalorder %s16, 2
      // Predicated region
      $region17: #{dense_bn_forward.1} parent=5 // pred_check
        %p144 = pneg %p143
      $region18: #{dense_bn_forward.1} parent=5 // pred_check_branch
        %146 = sbr.rel (%p144) target = $region20
      $region19: #{dense_bn_forward.1} parent=5 // pred_region
        // Predicated region
        $region21: #{dense_bn_forward.1} parent=19 // pred_check
          %p147 = pneg %p57
        $region22: #{dense_bn_forward.1} parent=19 // pred_check_branch
          %149 = sbr.rel (%p147) target = $region24
        $region23: #{dense_bn_forward.1} parent=19 // pred_region
          %s150 = sand.u32 %s16, 1
          %s151 = scalar_lea.sflag [#allocation6], %s150
          %s152 = sand.u32 %s47, 1
          %s153 = smul.addr %s152, 64
          %s154 = scalar_lea.vmem [#allocation5], %s153
          %s156 = ssub.s32 1024, 1024
          %157 = vsyncadd %s151, %s156
          %s158 = smul.addr %s16, 128
          %s159 = scalar_lea.hbm %s1, %s158
          %s160 = sshll.u32 %s154, 4
          %s161 = int_to_ptr.vmem [resolvable:$true] %s160
          %166 = dma.hbm_to_vmem [thread:$0]  %s159, 1024, %s161, %s151, 256, 128, 8
        $region24: #{dense_bn_forward.1} parent=19 // pred_fallthru
          _
        // Predicated region
        $region25: #{dense_bn_forward.1} parent=19 // pred_check
          %p167 = pneg %p83
        $region26: #{dense_bn_forward.1} parent=19 // pred_check_branch
          %169 = sbr.rel (%p167) target = $region28
        $region27: #{dense_bn_forward.1} parent=19 // pred_region
          %s170 = sand.u32 %s16, 1
          %s171 = scalar_lea.sflag [#allocation6], %s170
          %s172 = sand.u32 %s73, 1
          %s173 = smul.addr %s172, 4
          %s174 = scalar_lea.vmem [#allocation7], %s173
          %s176 = ssub.s32 64, 64
          %177 = vsyncadd %s171, %s176
          %s178 = smul.addr %s16, 64
          %s179 = scalar_lea.hbm %s2, %s178
          %s181 = sshll.u32 %s174, 4
          %s182 = int_to_ptr.vmem [resolvable:$true] %s181
          %184 = dma.hbm_to_vmem [thread:$0]  %s179, 64, %s182, %s171
        $region28: #{dense_bn_forward.1} parent=19 // pred_fallthru
          _
      $region20: #{dense_bn_forward.1} parent=5 // pred_fallthru
        _
      %p185 = scmp.le.s32.totalorder 1, %s16
      %p186 = scmp.lt.s32.totalorder %s16, 3
      %p187 = pnand %p185, %p186
      %p188 = pneg %p187
      // Predicated region
      $region29: #{dense_bn_forward.1} parent=5 // pred_check
        _
      $region30: #{dense_bn_forward.1} parent=5 // pred_check_branch
        %190 = sbr.rel (%p187) target = $region32
      $region31: #{dense_bn_forward.1} parent=5 // pred_region
        %s191 = ssub.s32 %s16, 1
        // Predicated region
        $region33: #{dense_bn_forward.1} parent=31 // pred_check
          %p192 = pneg %p37
        $region34: #{dense_bn_forward.1} parent=31 // pred_check_branch
          %194 = sbr.rel (%p192) target = $region36
        $region35: #{dense_bn_forward.1} parent=31 // pred_region
          %195 = dma.done [#allocation3], 256
        $region36: #{dense_bn_forward.1} parent=31 // pred_fallthru
          _
        %s196 = sand.u32 %s21, 1
        %s197 = scalar_lea.sflag [#allocation6], %s196
        %s198 = sand.u32 %s50, 1
        %s199 = smul.addr %s198, 64
        %s200 = scalar_lea.vmem [#allocation5], %s199
        // Predicated region
        $region37: #{dense_bn_forward.1} parent=31 // pred_check
          %p201 = pneg %p63
        $region38: #{dense_bn_forward.1} parent=31 // pred_check_branch
          %203 = sbr.rel (%p201) target = $region40
        $region39: #{dense_bn_forward.1} parent=31 // pred_region
          %204 = dma.done %s197, 1024
        $region40: #{dense_bn_forward.1} parent=31 // pred_fallthru
          _
        %s205 = sand.u32 %s21, 1
        %s206 = scalar_lea.sflag [#allocation6], %s205
        %s207 = sand.u32 %s76, 1
        %s208 = smul.addr %s207, 4
        %s209 = scalar_lea.vmem [#allocation7], %s208
        // Predicated region
        $region41: #{dense_bn_forward.1} parent=31 // pred_check
          %p210 = pneg %p89
        $region42: #{dense_bn_forward.1} parent=31 // pred_check_branch
          %212 = sbr.rel (%p210) target = $region44
        $region43: #{dense_bn_forward.1} parent=31 // pred_region
          %213 = dma.done %s206, 64
        $region44: #{dense_bn_forward.1} parent=31 // pred_fallthru
          _
        %p214 = pneg %p37
        %p215 = pneg %p34
        %s216 = sand.u32 %s21, 1
        %s217 = scalar_lea.sflag [#allocation6], %s216
        %s218 = sand.u32 %s50, 1
        %s219 = smul.addr %s218, 64
        %s220 = scalar_lea.vmem [#allocation5], %s219
        %p221 = pneg %p63
        %p222 = pneg %p60
        %s223 = sand.u32 %s21, 1
        %s224 = scalar_lea.sflag [#allocation6], %s223
        %s225 = sand.u32 %s76, 1
        %s226 = smul.addr %s225, 4
        %s227 = scalar_lea.vmem [#allocation7], %s226
        %p228 = pneg %p89
        %p229 = pneg %p86
        %p230 = pneg %p115
        %p231 = pneg %p112
        %s232 = sand.u32 %s102, 1
        %s233 = scalar_lea.sflag [#allocation4], %s232
        %s234 = sand.u32 %s102, 1
        %s235 = smul.addr %s234, 16
        %s236 = scalar_lea.vmem [#allocation8], %s235
        %v237 = vld [vmem:[#allocation2] sm:$0xff]
        %v238 = vld [vmem:[#allocation2 + $0x8] sm:$0xff]
        %v239 = vld [vmem:[%s200] sm:$0xff]
        %v240 = vld [vmem:[%s200 + $0x8] sm:$0xff]
        %v241 = vld [vmem:[%s200 + $0x10] sm:$0xff]
        %v242 = vld [vmem:[%s200 + $0x18] sm:$0xff]
        %v243 = vld [vmem:[%s200 + $0x20] sm:$0xff]
        %v244 = vld [vmem:[%s200 + $0x28] sm:$0xff]
        %v245 = vld [vmem:[%s200 + $0x30] sm:$0xff]
        %v246 = vld [vmem:[%s200 + $0x38] sm:$0xff]
        %v247 = vld [vmem:[%s209] sm:$0x7]
        %v248 = vlaneseq
        %v249 = vshrl.u32 %v248, 7
        %v250 = vsub.s32 0, %v249
        %v251 = vrot.slane %v247, %v250
        %vm252 = vcmask 523264
        %v254 = vsel %vm252, %v237, 0
        %v257 = vsel %vm252, %v238, 0
        %259 = vmatprep.subr.mxu0 0.0
        %260 = vmatpush1.msra.mxu0 %v239
        %261 = vmatprep.subr.mxu0 0.0
        %262 = vmatpush1.msra.mxu0 %v240
        %263 = vmatprep.subr.mxu0 0.0
        %264 = vmatpush1.msra.mxu0 %v241
        %265 = vmatprep.subr.mxu0 0.0
        %266 = vmatpush1.msra.mxu0 %v242
        %267 = vmatprep.subr.mxu0 0.0
        %268 = vmatpush1.msra.mxu0 %v243
        %269 = vmatprep.subr.mxu0 0.0
        %270 = vmatpush1.msra.mxu0 %v244
        %271 = vmatprep.subr.mxu0 0.0
        %272 = vmatpush1.msra.mxu0 %v245
        %273 = vmatprep.subr.mxu0 0.0
        %274 = vmatpush1.msra.mxu0 %v246
        %275 = vmatprep.subr.mxu0 0.0
        %276 = vmatpush1.msra.mxu0 0.0
        %277 = vmatprep.subr.mxu0 0.0
        %278 = vmatpush1.msra.mxu0 0.0
        %279 = vmatprep.subr.mxu0 0.0
        %280 = vmatpush1.msra.mxu0 0.0
        %281 = vmatprep.subr.mxu0 0.0
        %282 = vmatpush1.msra.mxu0 0.0
        %283 = vmatprep.subr.mxu0 0.0
        %284 = vmatpush1.msra.mxu0 0.0
        %285 = vmatprep.subr.mxu0 0.0
        %286 = vmatpush1.msra.mxu0 0.0
        %287 = vmatprep.subr.mxu0 0.0
        %288 = vmatpush1.msra.mxu0 0.0
        %289 = vmatprep.subr.mxu0 0.0
        %290 = vmatpush1.msra.mxu0 0.0
        %291 = vmatprep.subr.mxu0 0.0
        %292 = vmatpush1.msra.mxu0 0.0
        %293 = vmatprep.subr.mxu0 0.0
        %294 = vmatpush1.msra.mxu0 0.0
        %295 = vmatprep.subr.mxu0 0.0
        %296 = vmatpush1.msra.mxu0 0.0
        %297 = vmatprep.subr.mxu0 0.0
        %298 = vmatpush1.msra.mxu0 0.0
        %299 = vmatprep.subr.mxu0 0.0
        %300 = vmatpush1.msra.mxu0 0.0
        %301 = vmatprep.subr.mxu0 0.0
        %302 = vmatpush1.msra.mxu0 0.0
        %303 = vmatprep.subr.mxu0 0.0
        %304 = vmatpush1.msra.mxu0 0.0
        %305 = vmatprep.subr.mxu0 0.0
        %306 = vmatpush1.msra.mxu0 0.0
        %307 = vmatprep.subr.mxu0 0.0
        %308 = vmatpush1.msra.mxu0 0.0
        %309 = vmatprep.subr.mxu0 0.0
        %310 = vmatpush1.msra.mxu0 0.0
        %311 = vmatprep.subr.mxu0 0.0
        %312 = vmatpush1.msra.mxu0 0.0
        %313 = vmatprep.subr.mxu0 0.0
        %314 = vmatpush1.msra.mxu0 0.0
        %315 = vmatprep.subr.mxu0 0.0
        %316 = vmatpush1.msra.mxu0 0.0
        %317 = vmatprep.subr.mxu0 0.0
        %318 = vmatpush1.msra.mxu0 0.0
        %319 = vmatprep.subr.mxu0 0.0
        %320 = vmatpush1.msra.mxu0 0.0
        %321 = vmatprep.subr.mxu0 0.0
        %322 = vmatpush1.msra.mxu0 0.0
        %323 = vmatprep.mubr.f32.mxu0 0.0
        %324 = vmatmul.mubr.f32.gmra.mrb[0].mxu0 %v254
        %v325 = vpop.f32.mrb[0].mxu0
        %v326 = vadd.f32 %v251, %v325
        %v327 = vpop.f32.mrb[0].mxu0
        %328 = vmatprep.mubr.f32.mxu0 0.0
        %329 = vmatmul.mubr.f32.gmra.mrb[0].mxu0 %v257
        %v330 = vpop.f32.mrb[0].mxu0
        %v331 = vadd.f32 %v251, %v330
        %v332 = vpop.f32.mrb[0].mxu0
        %333 = vdwg.mxu0
        %v334 = vadd.f32 %v326, %v331
        %v335 = vrot.slane %v334, 4
        %v336 = vadd.f32 %v334, %v335
        %v337 = vrot.slane %v336, 2
        %v338 = vadd.f32 %v336, %v337
        %v339 = vrot.slane %v338, 1
        %v340 = vadd.f32 %v338, %v339
        %v341 = vrcp.pop 16.0
        %v342 = vmul.f32 %v340, %v341
        %v343 = vsub.f32 %v326, %v342
        %v344 = vsub.f32 %v331, %v342
        %v345 = vmul.f32 %v343, %v343
        %v346 = vmul.f32 %v344, %v344
        %v347 = vadd.f32 %v345, %v346
        %v348 = vrot.slane %v347, 4
        %v349 = vadd.f32 %v347, %v348
        %v350 = vrot.slane %v349, 2
        %v351 = vadd.f32 %v349, %v350
        %v352 = vrot.slane %v351, 1
        %v353 = vadd.f32 %v351, %v352
        %v354 = vmul.f32 %v353, %v341
        %v355 = vadd.f32 %v354, 1e-05
        %v356 = vrsqrt.pop %v355
        %v357 = vmul.f32 %v247, %v356
        %v358 = vmul.f32 %v342, %v357
        %v360 = vrot.slane %v358, 7
        %v362 = vsub.f32 %v247, %v360
        %v363 = vlaneseq
        %v364 = vshrl.u32 %v363, 7
        %v365 = vsub.s32 1, %v364
        %v366 = vrot.slane %v357, %v365
        %v367 = vmul.f32 %v326, %v366
        %v368 = vmul.f32 %v331, %v366
        %v369 = vlaneseq
        %v370 = vshrl.u32 %v369, 7
        %v371 = vsub.s32 2, %v370
        %v372 = vrot.slane %v362, %v371
        %v373 = vadd.f32 %v367, %v372
        %v374 = vadd.f32 %v368, %v372
        %v375 = vsub.f32 0.0, %v373
        %v376 = vsub.f32 0.0, %v374
        %v377 = vmul.f32 %v375, 1.442695
        %v378 = vpow.pop %v377
        %v379 = vmul.f32 %v376, 1.442695
        %v380 = vpow.pop %v379
        %v381 = vadd.f32 %v378, 1.0
        %v382 = vadd.f32 %v380, 1.0
        %v383 = vrcp.pop %v381
        %v384 = vrcp.pop %v382
        %385 = vst [vmem:[%s236] sm:$0xff] %v383
        %386 = vst [vmem:[%s236 + $0x8] sm:$0xff] %v384
        %s387 = sand.u32 %s102, 1
        %s388 = scalar_lea.sflag [#allocation4], %s387
        %s389 = sand.u32 %s102, 1
        %s390 = smul.addr %s389, 16
        %s391 = scalar_lea.vmem [#allocation8], %s390
        // Predicated region
        $region45: #{dense_bn_forward.1} parent=31 // pred_check
          %p392 = pneg %p112
        $region46: #{dense_bn_forward.1} parent=31 // pred_check_branch
          %394 = sbr.rel (%p392) target = $region48
        $region47: #{dense_bn_forward.1} parent=31 // pred_region
          %s396 = ssub.s32 256, 256
          %397 = vsyncadd %s388, %s396
          %s398 = smul.addr %s21, 128
          %s399 = scalar_lea.hbm %s3, %s398
          %s400 = sshll.u32 %s391, 4
          %s401 = int_to_ptr.vmem [resolvable:$true] %s400
          %406 = dma.vmem_to_hbm [thread:$0]  %s401, 256, %s399, %s388, 128, 256, 8
        $region48: #{dense_bn_forward.1} parent=31 // pred_fallthru
          _
      $region32: #{dense_bn_forward.1} parent=5 // pred_fallthru
        _
      %p407 = scmp.le.s32.totalorder 2, %s16
      // Predicated region
      $region49: #{dense_bn_forward.1} parent=5 // pred_check
        %p408 = pneg %p407
      $region50: #{dense_bn_forward.1} parent=5 // pred_check_branch
        %410 = sbr.rel (%p408) target = $region52
      $region51: #{dense_bn_forward.1} parent=5 // pred_region
        %s411 = ssub.s32 %s16, 2
        // Predicated region
        $region53: #{dense_bn_forward.1} parent=51 // pred_check
          %p412 = pneg %p118
        $region54: #{dense_bn_forward.1} parent=51 // pred_check_branch
          %414 = sbr.rel (%p412) target = $region56
        $region55: #{dense_bn_forward.1} parent=51 // pred_region
          %s415 = sand.u32 %s103, 1
          %s416 = scalar_lea.sflag [#allocation4], %s415
          %s417 = sand.u32 %s103, 1
          %s418 = smul.addr %s417, 16
          %s419 = scalar_lea.vmem [#allocation8], %s418
          %420 = dma.done %s416, 256
        $region56: #{dense_bn_forward.1} parent=51 // pred_fallthru
          _
      $region52: #{dense_bn_forward.1} parent=5 // pred_fallthru
        _
    $region6: #{dense_bn_forward.1} parent=1 // loop_footer
      %s20 = sadd.s32 1, %s16
    $region7: #{dense_bn_forward.1} parent=1 // loop_footer_branch
      %15 = sbr.rel target = $region3
    $region8: #{dense_bn_forward.1} parent=1 // loop_exit
      _
    %421 = vsyncpa [#allocation3], 1
    %s422 = scalar_lea.sflag [#allocation3], 1
    %423 = vsyncpa %s422, 1
    %424 = vsyncpa [#allocation6], 1
    %s425 = scalar_lea.sflag [#allocation6], 1
    %426 = vsyncpa %s425, 1
    %427 = vsyncpa [#allocation4], 1
    %s428 = scalar_lea.sflag [#allocation4], 1
    %429 = vsyncpa %s428, 1

</llo_original>
